<compile_context>
chip_gen: v5e
topology: v5e:2x2
jax: 0.10.0
libtpu: 0.0.40
codegen_flags: <defaults>
</compile_context>

<pallas_src>
import numpy as np
import jax
import jax.numpy as jnp
from jax.experimental import pallas as pl
from jax.experimental.pallas import tpu as pltpu


# --------------------------------------------------------------------------
# Pallas kernel: one peephole-LSTM cell update for a (tb, ·) batch tile.
# --------------------------------------------------------------------------
def _peephole_lstm_cell_kernel(packed_ref, w_ref, tab_ref, out_ref):
    """packed_ref: (tb, H+IN+H)  activations packed as [c | x | h]
       w_ref     : (H+IN+H, 4H)  fused weight [0 ; W_x ; W_h], gate order i|f|g|o
       tab_ref   : (5, 4H)       rows: bias, peep_ifg, scale, offset, [W_co|0|0|0]
       out_ref   : (tb, 2H)      [h_next | c_next]
    """
    H4 = tab_ref.shape[1]
    H = H4 // 4

    packed = packed_ref[...]
    c = packed[:, 0:H]

    # Single fused gate matmul (the c block has zero weight rows).
    gates = (jnp.dot(packed, w_ref[...], preferred_element_type=jnp.float32)
             + tab_ref[0:1, :])

    # Lane-dense (4H = 128-wide) elementwise phase.
    peep = tab_ref[1:2, :]      # [W_ci | W_cf | 0 | 0]
    s = tab_ref[2:3, :]         # [0.5  | 0.5  | 1 | 0.5]
    t = tab_ref[3:4, :]         # [0.5  | 0.5  | 0 | 0.5]
    c4 = jnp.concatenate([c, c, c, c], axis=1)
    # sigmoid(z) = 0.5*tanh(z/2)+0.5 for i/f lanes, tanh(z) for g lanes,
    # all with one EUP push over the full 128-lane vreg.
    act = s * jnp.tanh(s * (gates + peep * c4)) + t

    i = act[:, 0:H]
    f = act[:, H:2 * H]
    g = act[:, 2 * H:3 * H]
    c_next = f * c + i * g

    # Output gate peeks at the *new* cell state -> computed separately.
    w_co = tab_ref[4:5, 0:H]
    o = 0.5 * (jnp.tanh(0.5 * (gates[:, 3 * H:4 * H] + w_co * c_next)) + 1.0)

    out_ref[...] = jnp.concatenate([o * jnp.tanh(c_next), c_next], axis=1)


# --------------------------------------------------------------------------
# Wrapper: packed activations, batch grid, weights resident across steps.
# --------------------------------------------------------------------------
def peephole_lstm_cell(x, h, c, fused, *, block_b=1024):
    B, _ = x.shape
    H = h.shape[1]
    K = fused["w"].shape[0]          # H + IN + H
    H4 = 4 * H

    # Pack [c | x | h]; pad batch only to a sublane multiple (fused by XLA
    # into the same copy as the concat).
    packed = jnp.concatenate([c, x, h], axis=1).astype(jnp.float32)
    Bp = ((B + 7) // 8) * 8
    if Bp != B:
        packed = jnp.pad(packed, ((0, Bp - B), (0, 0)))

    # Batch tile: multiple of 8, capped at block_b.
    tb = max(8, (min(block_b, Bp) // 8) * 8)
    # v7x megacore: make sure a large single-tile batch splits into >=2 steps.
    if pl.cdiv(Bp, tb) < 2 and Bp >= 256:
        tb = ((pl.cdiv(Bp, 2) + 7) // 8) * 8

    grid = (pl.cdiv(Bp, tb),)        # trailing partial block is masked by Pallas

    out = pl.pallas_call(
        _peephole_lstm_cell_kernel,
        out_shape=jax.ShapeDtypeStruct((Bp, 2 * H), jnp.float32),
        grid_spec=pltpu.PrefetchScalarGridSpec(
            num_scalar_prefetch=0,
            grid=grid,
            in_specs=[
                pl.BlockSpec((tb, K), lambda i: (i, 0)),    # packed activations
                pl.BlockSpec((K, H4), lambda i: (0, 0)),    # fused weight (resident)
                pl.BlockSpec((5, H4), lambda i: (0, 0)),    # bias/peep/scale table
            ],
            out_specs=pl.BlockSpec((tb, 2 * H), lambda i: (i, 0)),
        ),
        compiler_params=pltpu.CompilerParams(
            dimension_semantics=("parallel",)),
    )(packed, fused["w"], fused["table"])

    return out[:B, :H], out[:B, H:]


# --------------------------------------------------------------------------
# Parameter init (PyTorch layout) and offline fusion.
# --------------------------------------------------------------------------
def init_params(key, input_size, hidden_size):
    keys = jax.random.split(key, 32)
    ki = iter(keys)

    def linear(in_dim, out_dim):
        bound = 1.0 / np.sqrt(in_dim)
        w = jax.random.uniform(next(ki), (out_dim, in_dim), jnp.float32, -bound, bound)
        b = jax.random.uniform(next(ki), (out_dim,), jnp.float32, -bound, bound)
        return w, b

    p = {}
    for name, in_dim in [("ii", input_size), ("hi", hidden_size),
                         ("if", input_size), ("hf", hidden_size),
                         ("ig", input_size), ("hg", hidden_size),
                         ("io", input_size), ("ho", hidden_size)]:
        p["W_" + name], p["b_" + name] = linear(in_dim, hidden_size)
    p["W_ci"] = jax.random.normal(next(ki), (hidden_size,), jnp.float32)
    p["W_cf"] = jax.random.normal(next(ki), (hidden_size,), jnp.float32)
    p["W_co"] = jax.random.normal(next(ki), (hidden_size,), jnp.float32)
    return p


def fuse_params(p, hidden_size):
    H = hidden_size
    f32 = jnp.float32
    # Gate order i | f | g | o ; packed-input row order [c | x | h].
    w_x = jnp.concatenate([p["W_ii"].T, p["W_if"].T, p["W_ig"].T, p["W_io"].T], axis=1)
    w_h = jnp.concatenate([p["W_hi"].T, p["W_hf"].T, p["W_hg"].T, p["W_ho"].T], axis=1)
    w = jnp.concatenate([jnp.zeros((H, 4 * H), f32), w_x, w_h], axis=0)

    bias = jnp.concatenate([p["b_ii"] + p["b_hi"], p["b_if"] + p["b_hf"],
                            p["b_ig"] + p["b_hg"], p["b_io"] + p["b_ho"]], axis=0)
    zH = jnp.zeros((H,), f32)
    hH = jnp.full((H,), 0.5, f32)
    oH = jnp.ones((H,), f32)
    peep_ifg = jnp.concatenate([p["W_ci"], p["W_cf"], zH, zH], axis=0)
    scale = jnp.concatenate([hH, hH, oH, hH], axis=0)   # 0.5 -> sigmoid, 1 -> tanh
    offset = jnp.concatenate([hH, hH, zH, hH], axis=0)
    wco_row = jnp.concatenate([p["W_co"], zH, zH, zH], axis=0)
    table = jnp.stack([bias, peep_ifg, scale, offset, wco_row], axis=0)

    return {"w": jnp.asarray(w, f32), "table": jnp.asarray(table, f32)}


# --------------------------------------------------------------------------
# Pure-JAX reference (unfused weights, same semantics as the PyTorch module).
# --------------------------------------------------------------------------
def reference(x, h, c, p):
    hp = jax.lax.Precision.HIGHEST

    def lin(v, w, b):
        return jnp.dot(v, w.T, precision=hp) + b

    i = jax.nn.sigmoid(lin(x, p["W_ii"], p["b_ii"]) + lin(h, p["W_hi"], p["b_hi"])
                       + p["W_ci"] * c)
    f = jax.nn.sigmoid(lin(x, p["W_if"], p["b_if"]) + lin(h, p["W_hf"], p["b_hf"])
                       + p["W_cf"] * c)
    g = jnp.tanh(lin(x, p["W_ig"], p["b_ig"]) + lin(h, p["W_hg"], p["b_hg"]))
    c_next = f * c + i * g
    o = jax.nn.sigmoid(lin(x, p["W_io"], p["b_io"]) + lin(h, p["W_ho"], p["b_ho"])
                       + p["W_co"] * c_next)
    return o * jnp.tanh(c_next), c_next


if __name__ == "__main__":
    key = jax.random.PRNGKey(0)
    IN_SIZE, HIDDEN = 8, 32
    kp, kd = jax.random.split(key)
    params = init_params(kp, IN_SIZE, HIDDEN)
    fused = fuse_params(params, HIDDEN)

    ok = True
    # Test 1: tiny batch (single grid step, padded to 8 sublanes).
    # Test 2: ragged batch, forced small tile -> multi-step parallel grid.
    # Test 3: partial trailing block (Bp=104, tb=64 -> masked last block).
    for B, blk in [(2, 1024), (33, 8), (100, 64)]:
        kx, kh, kc, kd = jax.random.split(kd, 4)
        x = jax.random.normal(kx, (B, IN_SIZE), jnp.float32)
        h = jax.random.normal(kh, (B, HIDDEN), jnp.float32)
        c = jax.random.normal(kc, (B, HIDDEN), jnp.float32)

        h_next, c_next = peephole_lstm_cell(x, h, c, fused, block_b=blk)
        h_next, c_next = jax.block_until_ready((h_next, c_next))

        h_ref, c_ref = reference(x, h, c, params)
        ok &= np.allclose(np.asarray(h_next), np.asarray(h_ref), atol=1e-4, rtol=1e-4)
        ok &= np.allclose(np.asarray(c_next), np.asarray(c_ref), atol=1e-4, rtol=1e-4)

    assert ok
    print("KERNEL_OK")
</pallas_src>

<mosaic_0001>
module attributes {stable_mosaic.version = 11 : i64} {
  func.func @_peephole_lstm_cell_kernel(%arg0: i32, %arg1: memref<8x72xf32, #tpu.memory_space<vmem>>, %arg2: memref<72x128xf32, #tpu.memory_space<vmem>>, %arg3: memref<5x128xf32, #tpu.memory_space<vmem>>, %arg4: memref<8x64xf32, #tpu.memory_space<vmem>>) attributes {dimension_semantics = [#tpu.dimension_semantics<parallel>], iteration_bounds = array<i64: 1>, scalar_prefetch = 0 : i64, scratch_operands = 0 : i64, tpu.core_type = #tpu.core_type<tc>, window_params = [{transform_indices = @transform_0, window_bounds = array<i64: 8, 72>}, {pipeline_mode = #tpu.pipeline_mode<synchronous>, transform_indices = @transform_1, window_bounds = array<i64: 72, 128>}, {pipeline_mode = #tpu.pipeline_mode<synchronous>, transform_indices = @transform_2, window_bounds = array<i64: 5, 128>}, {transform_indices = @transform_3, window_bounds = array<i64: 8, 64>}]} {
    %c0 = arith.constant 0 : index
    %c0_0 = arith.constant 0 : index
    %0 = vector.load %arg1[%c0, %c0_0] : memref<8x72xf32, #tpu.memory_space<vmem>>, vector<8x72xf32>
    %1 = vector.extract_strided_slice %0 {offsets = [0, 0], sizes = [8, 32], strides = [1, 1]} : vector<8x72xf32> to vector<8x32xf32>
    %c0_1 = arith.constant 0 : index
    %c0_2 = arith.constant 0 : index
    %2 = vector.load %arg2[%c0_1, %c0_2] : memref<72x128xf32, #tpu.memory_space<vmem>>, vector<72x128xf32>
    %cst = arith.constant dense<0.000000e+00> : vector<8x128xf32>
    %3 = tpu.matmul %0, %2, %cst {dimension_numbers = #tpu.dot_dimension_numbers<[1], [0], [0], [1], [0, 0, 1, 1], [], []>} : vector<8x72xf32>, vector<72x128xf32>, vector<8x128xf32> -> vector<8x128xf32>
    %c0_3 = arith.constant 0 : index
    %c0_4 = arith.constant 0 : index
    %4 = vector.load %arg3[%c0_3, %c0_4] : memref<5x128xf32, #tpu.memory_space<vmem>>, vector<1x128xf32>
    %5 = vector.broadcast %4 : vector<1x128xf32> to vector<8x128xf32>
    %6 = arith.addf %3, %5 : vector<8x128xf32>
    %c1 = arith.constant 1 : index
    %c0_5 = arith.constant 0 : index
    %7 = vector.load %arg3[%c1, %c0_5] : memref<5x128xf32, #tpu.memory_space<vmem>>, vector<1x128xf32>
    %c2 = arith.constant 2 : index
    %c0_6 = arith.constant 0 : index
    %8 = vector.load %arg3[%c2, %c0_6] : memref<5x128xf32, #tpu.memory_space<vmem>>, vector<1x128xf32>
    %c3 = arith.constant 3 : index
    %c0_7 = arith.constant 0 : index
    %9 = vector.load %arg3[%c3, %c0_7] : memref<5x128xf32, #tpu.memory_space<vmem>>, vector<1x128xf32>
    %10 = tpu.concatenate %1, %1, %1, %1 in 1 : vector<8x32xf32>, vector<8x32xf32>, vector<8x32xf32>, vector<8x32xf32> -> vector<8x128xf32>
    %11 = vector.broadcast %7 : vector<1x128xf32> to vector<8x128xf32>
    %12 = arith.mulf %11, %10 : vector<8x128xf32>
    %13 = arith.addf %6, %12 : vector<8x128xf32>
    %14 = vector.broadcast %8 : vector<1x128xf32> to vector<8x128xf32>
    %15 = arith.mulf %14, %13 : vector<8x128xf32>
    %16 = math.tanh %15 : vector<8x128xf32>
    %17 = vector.broadcast %8 : vector<1x128xf32> to vector<8x128xf32>
    %18 = arith.mulf %17, %16 : vector<8x128xf32>
    %19 = vector.broadcast %9 : vector<1x128xf32> to vector<8x128xf32>
    %20 = arith.addf %18, %19 : vector<8x128xf32>
    %21 = vector.extract_strided_slice %20 {offsets = [0, 0], sizes = [8, 32], strides = [1, 1]} : vector<8x128xf32> to vector<8x32xf32>
    %22 = vector.extract_strided_slice %20 {offsets = [0, 32], sizes = [8, 32], strides = [1, 1]} : vector<8x128xf32> to vector<8x32xf32>
    %23 = vector.extract_strided_slice %20 {offsets = [0, 64], sizes = [8, 32], strides = [1, 1]} : vector<8x128xf32> to vector<8x32xf32>
    %24 = arith.mulf %22, %1 : vector<8x32xf32>
    %25 = arith.mulf %21, %23 : vector<8x32xf32>
    %26 = arith.addf %24, %25 : vector<8x32xf32>
    %c4 = arith.constant 4 : index
    %c0_8 = arith.constant 0 : index
    %27 = vector.load %arg3[%c4, %c0_8] : memref<5x128xf32, #tpu.memory_space<vmem>>, vector<1x32xf32>
    %28 = vector.extract_strided_slice %6 {offsets = [0, 96], sizes = [8, 32], strides = [1, 1]} : vector<8x128xf32> to vector<8x32xf32>
    %29 = vector.broadcast %27 : vector<1x32xf32> to vector<8x32xf32>
    %30 = arith.mulf %29, %26 : vector<8x32xf32>
    %31 = arith.addf %28, %30 : vector<8x32xf32>
    %cst_9 = arith.constant 5.000000e-01 : f32
    %32 = vector.broadcast %cst_9 : f32 to vector<8x32xf32>
    %33 = arith.mulf %32, %31 : vector<8x32xf32>
    %34 = math.tanh %33 : vector<8x32xf32>
    %cst_10 = arith.constant 1.000000e+00 : f32
    %35 = vector.broadcast %cst_10 : f32 to vector<8x32xf32>
    %36 = arith.addf %34, %35 : vector<8x32xf32>
    %cst_11 = arith.constant 5.000000e-01 : f32
    %37 = vector.broadcast %cst_11 : f32 to vector<8x32xf32>
    %38 = arith.mulf %37, %36 : vector<8x32xf32>
    %39 = math.tanh %26 : vector<8x32xf32>
    %40 = arith.mulf %38, %39 : vector<8x32xf32>
    %41 = tpu.concatenate %40, %26 in 1 : vector<8x32xf32>, vector<8x32xf32> -> vector<8x64xf32>
    %c0_12 = arith.constant 0 : index
    %c0_13 = arith.constant 0 : index
    %42 = vector.load %arg4[%c0_12, %c0_13] : memref<8x64xf32, #tpu.memory_space<vmem>>, vector<8x64xf32>
    tpu.vector_store %arg4[%c0_12, %c0_13], %41 {strides = array<i32>} : memref<8x64xf32, #tpu.memory_space<vmem>>, vector<8x64xf32>,
    return
  }
  func.func @transform_0(%arg0: i32) -> (i32, i32) {
    %c0_i32 = arith.constant 0 : i32
    %c0_i32_0 = arith.constant 0 : i32
    return %arg0, %c0_i32 : i32, i32
  }
  func.func @transform_1(%arg0: i32) -> (i32, i32) {
    %c0_i32 = arith.constant 0 : i32
    %c0_i32_0 = arith.constant 0 : i32
    %c0_i32_1 = arith.constant 0 : i32
    return %c0_i32, %c0_i32_0 : i32, i32
  }
  func.func @transform_2(%arg0: i32) -> (i32, i32) {
    %c0_i32 = arith.constant 0 : i32
    %c0_i32_0 = arith.constant 0 : i32
    %c0_i32_1 = arith.constant 0 : i32
    return %c0_i32, %c0_i32_0 : i32, i32
  }
  func.func @transform_3(%arg0: i32) -> (i32, i32) {
    %c0_i32 = arith.constant 0 : i32
    %c0_i32_0 = arith.constant 0 : i32
    return %arg0, %c0_i32 : i32, i32
  }
}

</mosaic_0001>

<llo_original>
// kernel: tpu_custom_call.1
$region0: #{tpu_custom_call.1}
  #allocation0 [shape = 'u32[]', space=smem, size = 0x4, offset = 0x4, fixed_abs, tag = 'smem constant byte address 0x4 - core index']
  #allocation1 [shape = 'u32[72,128]{1,0:T(1,128)}', space=vmem, size = 0x9000, scoped, tag = 'internal scratch']
  %s0 = inlined_call_operand.hbm [shape: f32[8,72], index: 0, kind: input, shape index: {}]
  %s1 = inlined_call_operand.hbm [shape: f32[72,128], index: 1, kind: input, shape index: {}]
  %s2 = inlined_call_operand.hbm [shape: f32[5,128], index: 2, kind: input, shape index: {}]
  %s3 = inlined_call_operand.hbm [shape: f32[8,64], index: 3, kind: output, shape index: {}]
  %s4 = sld [smem:[#allocation0]]
  $region34: #{tpu_custom_call.1} parent=0
    _
  %s6 = ssub.s32 1, %s4
  %s7 = scalar_select 0, %s6, %s4
  $region1: #{tpu_custom_call.1} parent=0
    #allocation2 [shape = 'u8[4096]{0}', space=vmem, size = 0x1000, scoped, tag = 'input window, operand 0, single buffered']
    #allocation3 [shape = 's32[1]{0}', space=sflag, size = 0x4, scoped, tag = 'scoped memory for tpu_custom_call.1']
    #allocation4 [shape = 's32[1]{0}', space=sflag, size = 0x4, scoped, tag = 'scoped memory for tpu_custom_call.1']
    #allocation5 [shape = 'u8[36864]{0}', space=vmem, size = 0x9000, scoped, tag = 'input window, operand 1, single buffered']
    #allocation6 [shape = 's32[1]{0}', space=sflag, size = 0x4, scoped, tag = 'scoped memory for tpu_custom_call.1']
    #allocation7 [shape = 'u8[4096]{0}', space=vmem, size = 0x1000, scoped, tag = 'input window, operand 2, single buffered']
    #allocation8 [shape = 'u8[4096]{0}', space=vmem, size = 0x1000, scoped, tag = 'output window, operand 0, single buffered']
    %8 = vsyncpa [#allocation3], 0
    %9 = vsyncpa [#allocation6], 0
    %10 = vsyncpa [#allocation4], 0
    // Predicated region
    $region2: #{tpu_custom_call.1} parent=1 // pred_check
      _
    $region3: #{tpu_custom_call.1} parent=1 // pred_check_branch
      %12 = sbr.rel (0) target = $region5
    $region4: #{tpu_custom_call.1} parent=1 // pred_region
      %14 = vsyncadd [#allocation3], 0
      %s16 = sshll.u32 %s0, 4
      %s17 = int_to_ptr.hbm [resolvable:$true] %s16
      %s18 = sshll.u32 [#allocation2], 4
      %s19 = int_to_ptr.vmem [resolvable:$true] %s18
      %21 = dma.hbm_to_vmem [thread:$0]  %s17, 128, %s19, [#allocation3]
    $region5: #{tpu_custom_call.1} parent=1 // pred_fallthru
      _
    // Predicated region
    $region6: #{tpu_custom_call.1} parent=1 // pred_check
      _
    $region7: #{tpu_custom_call.1} parent=1 // pred_check_branch
      %23 = sbr.rel (0) target = $region9
    $region8: #{tpu_custom_call.1} parent=1 // pred_region
      %25 = vsyncadd [#allocation6], 0
      %s26 = sshll.u32 %s1, 4
      %s27 = int_to_ptr.hbm [resolvable:$true] %s26
      %s28 = sshll.u32 [#allocation5], 4
      %s29 = int_to_ptr.vmem [resolvable:$true] %s28
      %34 = dma.hbm_to_vmem [thread:$0]  %s27, 1152, %s29, [#allocation6], 128, 128, 8
    $region9: #{tpu_custom_call.1} parent=1 // pred_fallthru
      _
    // Predicated region
    $region10: #{tpu_custom_call.1} parent=1 // pred_check
      _
    $region11: #{tpu_custom_call.1} parent=1 // pred_check_branch
      %36 = sbr.rel (0) target = $region13
    $region12: #{tpu_custom_call.1} parent=1 // pred_region
      %38 = vsyncadd [#allocation6], 0
      %s40 = sshll.u32 %s2, 4
      %s41 = int_to_ptr.hbm [resolvable:$true] %s40
      %s42 = sshll.u32 [#allocation7], 4
      %s43 = int_to_ptr.vmem [resolvable:$true] %s42
      %45 = dma.hbm_to_vmem [thread:$0]  %s41, 128, %s43, [#allocation6]
    $region13: #{tpu_custom_call.1} parent=1 // pred_fallthru
      _
    // Predicated region
    $region14: #{tpu_custom_call.1} parent=1 // pred_check
      _
    $region15: #{tpu_custom_call.1} parent=1 // pred_check_branch
      %47 = sbr.rel (0) target = $region17
    $region16: #{tpu_custom_call.1} parent=1 // pred_region
      %49 = dma.done [#allocation3], 128
    $region17: #{tpu_custom_call.1} parent=1 // pred_fallthru
      _
    // Predicated region
    $region18: #{tpu_custom_call.1} parent=1 // pred_check
      _
    $region19: #{tpu_custom_call.1} parent=1 // pred_check_branch
      %51 = sbr.rel (0) target = $region21
    $region20: #{tpu_custom_call.1} parent=1 // pred_region
      %53 = dma.done [#allocation6], 1152
    $region21: #{tpu_custom_call.1} parent=1 // pred_fallthru
      _
    // Predicated region
    $region22: #{tpu_custom_call.1} parent=1 // pred_check
      _
    $region23: #{tpu_custom_call.1} parent=1 // pred_check_branch
      %55 = sbr.rel (0) target = $region25
    $region24: #{tpu_custom_call.1} parent=1 // pred_region
      %57 = dma.done [#allocation6], 128
    $region25: #{tpu_custom_call.1} parent=1 // pred_fallthru
      _
    %v58 = vld [vmem:[#allocation2] sm:$0xff]
    %v59 = vld [vmem:[#allocation5] sm:$0xff]
    %v60 = vld [vmem:[#allocation5 + $0x8] sm:$0xff]
    %v61 = vld [vmem:[#allocation5 + $0x10] sm:$0xff]
    %v62 = vld [vmem:[#allocation5 + $0x18] sm:$0xff]
    %v63 = vld [vmem:[#allocation5 + $0x20] sm:$0xff]
    %v64 = vld [vmem:[#allocation5 + $0x28] sm:$0xff]
    %v65 = vld [vmem:[#allocation5 + $0x30] sm:$0xff]
    %v66 = vld [vmem:[#allocation5 + $0x38] sm:$0xff]
    %v67 = vld [vmem:[#allocation5 + $0x40] sm:$0xff]
    %v68 = vld [vmem:[#allocation7] sm:$0x1]
    %v69 = vperm.slane %v68, 0
    %vm70 = vcmask 588800
    %v72 = vsel %vm70, %v58, 0
    %74 = vmatpush.msra.mxu0 0.0
    %75 = vmatpush.msra.mxu0 0.0
    %76 = vmatpush.msra.mxu0 0.0
    %77 = vmatpush.msra.mxu0 0.0
    %78 = vmatpush.msra.mxu0 0.0
    %79 = vmatpush.msra.mxu0 0.0
    %80 = vmatpush.msra.mxu0 0.0
    %81 = vmatpush.msra.mxu0 %v67
    %82 = vmatpush.msra.mxu0 %v66
    %83 = vmatpush.msra.mxu0 %v65
    %84 = vmatpush.msra.mxu0 %v64
    %85 = vmatpush.msra.mxu0 %v63
    %86 = vmatpush.msra.mxu0 %v62
    %87 = vmatpush.msra.mxu0 %v61
    %88 = vmatpush.msra.mxu0 %v60
    %89 = vmatpush.msra.mxu0 %v59
    %90 = vmatmul.f32.gmra.mxu0 %v72
    %v91 = vpop.f32.mrf.mxu0
    %v92 = vadd.f32 %v69, %v91
    %93 = vdwg.mxu0
    %v94 = vld [vmem:[#allocation7 + $0x1] sm:$0x1]
    %v95 = vld [vmem:[#allocation7 + $0x2] sm:$0x1]
    %v96 = vld [vmem:[#allocation7 + $0x3] sm:$0x1]
    %97 = vrot.lane.b32.xlu0 %v58, 32
    %v98 = vpop.permute.xlu0 %97
    %100 = vrot.lane.b32.xlu0 %v58, 64
    %v101 = vpop.permute.xlu0 %100
    %103 = vrot.lane.b32.xlu0 %v58, 96
    %v104 = vpop.permute.xlu0 %103
    %vm106 = vcmask 261120
    %v107 = vsel %vm106, %v58, %v98
    %vm108 = vcmask 523264
    %v109 = vsel %vm108, %v107, %v101
    %vm110 = vcmask 785408
    %v111 = vsel %vm110, %v109, %v104
    %v112 = vperm.slane %v94, 0
    %v113 = vmul.f32 %v112, %v111
    %v114 = vadd.f32 %v92, %v113
    %v115 = vperm.slane %v95, 0
    %v116 = vmul.f32 %v115, %v114
    %v117 = vtanh.pop %v116
    %v118 = vmul.f32 %v115, %v117
    %v119 = vperm.slane %v96, 0
    %v120 = vadd.f32 %v118, %v119
    %v121 = vmul.f32 %v120, %v98
    %123 = vrot.lane.b32.xlu0 %v120, 64
    %v124 = vpop.permute.xlu0 %123
    %v126 = vmul.f32 %v120, %v124
    %128 = vrot.lane.b32.xlu0 %v126, 32
    %v129 = vpop.permute.xlu0 %128
    %v131 = vadd.f32 %v121, %v129
    %v132 = vld [vmem:[#allocation7 + $0x4] sm:$0x1]
    %v133 = vperm.slane %v132, 0
    %135 = vrot.lane.b32.xlu0 %v131, 96
    %v136 = vpop.permute.xlu0 %135
    %v138 = vmul.f32 %v133, %v136
    %140 = vrot.lane.b32.xlu0 %v138, 96
    %v141 = vpop.permute.xlu0 %140
    %v143 = vadd.f32 %v92, %v141
    %v144 = vmul.f32 %v143, 0.5
    %v145 = vtanh.pop %v144
    %v146 = vadd.f32 %v145, 1.0
    %v147 = vmul.f32 %v146, 0.5
    %v148 = vtanh.pop %v131
    %150 = vrot.lane.b32.xlu0 %v148, 64
    %v151 = vpop.permute.xlu0 %150
    %v153 = vmul.f32 %v147, %v151
    %155 = vrot.lane.b32.xlu0 %v153, 32
    %v156 = vpop.permute.xlu0 %155
    %v158 = vsel %vm106, %v156, %v131
    %159 = vst.msk [vmem:[#allocation8] sm:$0xff] %vm108, %v158
    // Predicated region
    $region26: #{tpu_custom_call.1} parent=1 // pred_check
      _
    $region27: #{tpu_custom_call.1} parent=1 // pred_check_branch
      %161 = sbr.rel (0) target = $region29
    $region28: #{tpu_custom_call.1} parent=1 // pred_region
      %163 = vsyncadd [#allocation4], 0
      %s165 = sshll.u32 [#allocation8], 4
      %s166 = int_to_ptr.vmem [resolvable:$true] %s165
      %s167 = sshll.u32 %s3, 4
      %s168 = int_to_ptr.hbm [resolvable:$true] %s167
      %170 = dma.vmem_to_hbm [thread:$0]  %s166, 128, %s168, [#allocation4]
    $region29: #{tpu_custom_call.1} parent=1 // pred_fallthru
      _
    // Predicated region
    $region30: #{tpu_custom_call.1} parent=1 // pred_check
      _
    $region31: #{tpu_custom_call.1} parent=1 // pred_check_branch
      %172 = sbr.rel (0) target = $region33
    $region32: #{tpu_custom_call.1} parent=1 // pred_region
      %174 = dma.done [#allocation4], 128
    $region33: #{tpu_custom_call.1} parent=1 // pred_fallthru
      _
    %175 = vsyncpa [#allocation3], 1
    %176 = vsyncpa [#allocation6], 1
    %177 = vsyncpa [#allocation4], 1

</llo_original>
